<compile_context>
chip_gen: v7x
topology: tpu7x:2x2x1
jax: 0.10.0
libtpu: 0.0.40
codegen_flags: <defaults>
</compile_context>

<pallas_src>
import functools
import math

import numpy as np

import jax
import jax.numpy as jnp
from jax import lax
from jax.experimental import pallas as pl
from jax.experimental.pallas import tpu as pltpu


def _cdiv(a: int, b: int) -> int:
    return -(-a // b)


def _round_up(a: int, b: int) -> int:
    return _cdiv(a, b) * b


# Per-tile output budget.  2 (double-buffer) x 4 MiB + tiny constant rows stays
# comfortably under the scoped-VMEM defaults on v5e (16 MiB), v6e and v7x.
_TILE_BYTES = 4 * 1024 * 1024


def _pe_kernel(a_ref, b_ref, o_ref, *, tile_rows: int):
    """One (tile_rows, dim_p) tile:  out[r, j] = sin(row * A[j] + B[j]).

    A/B are per-lane constants precomputed on the host:
      A[j] = pack * rate[j % dim_out]
      B[j] = (j // dim_out) * rate[j % dim_out] + phase[j % dim_out]
    so  row * A + B == position * rate + phase, and sin(x + pi/2) == cos(x)
    folds the even/odd sin/cos select into a single EUP transcendental.
    The iota / int-add / f32-convert run on a (tile_rows, 1) column only; the
    full-tile per-element cost is one mul, one add and the EUP sin.
    """
    row0 = pl.program_id(0) * tile_rows
    rows = (row0 + lax.broadcasted_iota(jnp.int32, (tile_rows, 1), 0)).astype(
        jnp.float32
    )                                                # (tile_rows, 1)
    angle = rows * a_ref[...] + b_ref[...]           # bcast -> (tile_rows, dim_p)
    o_ref[...] = jnp.sin(angle).astype(o_ref.dtype)


def make_pe_table(dim_out: int, max_len: int, *, n_base: float = 10000.0,
                  dtype=jnp.float32):
    """Builds the positional-encoding table on TPU.

    Returns a (padded_positions, dim_out) array with padded_positions >= max_len;
    rows past max_len are extra (valid sin/cos of larger positions) and are
    meant to be sliced off by the caller (forward slices [:seq_len] anyway).
    """
    itemsize = jnp.dtype(dtype).itemsize

    # --- lane packing: fold `pack` consecutive positions into one row so the
    # output last dim is a (large) multiple of 128 -> unmasked lane-dense vst.
    pack_min = math.lcm(dim_out, 128) // dim_out
    dim_p_min = dim_out * pack_min
    if dim_p_min <= 2048:
        pack = pack_min * max(1, 512 // dim_p_min)   # widen toward ~512 lanes
    else:
        pack = 1                                     # lcm too wide; masked stores
    dim_p = dim_out * pack
    packed_rows = _cdiv(max_len, pack)

    # --- host-precomputed per-lane constants (f64 math, cast to f32 once)
    j = np.arange(dim_p)
    feat = j % dim_out                               # feature index i
    off = (j // dim_out).astype(np.float64)          # position offset within a row
    rate = 1.0 / np.power(float(n_base), 2.0 * np.floor(feat / 2.0) / float(dim_out))
    phase = np.where(feat % 2 == 0, 0.0, np.pi / 2.0)    # sin even / cos odd
    a_row = (pack * rate).astype(np.float32)[None, :]            # (1, dim_p)
    b_row = (off * rate + phase).astype(np.float32)[None, :]     # (1, dim_p)

    # --- tiling: tiles up to ~4 MiB (amortize the ~600-cycle/step overhead),
    # an even number of grid steps (>= 2) so the 'parallel' axis balances
    # across v7x's two TensorCores.
    bytes_per_row = dim_p * itemsize
    cap_rows = max(8, (_TILE_BYTES // bytes_per_row) // 8 * 8)
    if packed_rows <= 8:
        tile_rows, n_steps = 8, 1
    else:
        steps = max(2, _cdiv(packed_rows, cap_rows))
        steps += steps % 2                           # even -> v7x megacore balance
        tile_rows = _round_up(_cdiv(packed_rows, steps), 8)   # <= cap_rows
        n_steps = steps
    padded_rows = tile_rows * n_steps

    kernel = functools.partial(_pe_kernel, tile_rows=tile_rows)
    packed = pl.pallas_call(
        kernel,
        out_shape=jax.ShapeDtypeStruct((padded_rows, dim_p), dtype),
        grid_spec=pltpu.PrefetchScalarGridSpec(
            num_scalar_prefetch=0,
            grid=(n_steps,),
            in_specs=[pl.BlockSpec((1, dim_p), lambda i: (0, 0)),
                      pl.BlockSpec((1, dim_p), lambda i: (0, 0))],
            out_specs=pl.BlockSpec((tile_rows, dim_p), lambda i: (i, 0)),
        ),
        compiler_params=pltpu.CompilerParams(
            dimension_semantics=("parallel",),
        ),
        cost_estimate=pl.CostEstimate(
            flops=2 * padded_rows * dim_p,
            transcendentals=padded_rows * dim_p,
            bytes_accessed=padded_rows * dim_p * itemsize + 2 * dim_p * 4,
        ),
    )(jnp.asarray(a_row), jnp.asarray(b_row))

    # unpack lanes back to (positions, dim_out); row-major reshape, no slice here
    return packed.reshape(padded_rows * pack, dim_out)


class PositionalEncoder:
    """JAX/Pallas port of the PyTorch PositionalEncoder module."""

    def __init__(self, dim_out: int, max_len: int = 1000):
        self.dim_out = dim_out
        self.n = 10000.0
        self.max_len = max_len
        # Padded table (>= max_len positions), built on TPU by the kernel.
        # The [:max_len] / [:seq_len] slice is deferred to the accessors to
        # avoid an extra full HBM round-trip at init.
        self._table = make_pe_table(dim_out, max_len, n_base=self.n)

    @property
    def pe(self):
        # buffer 'pe' of shape (1, max_len, dim_out), matching the PyTorch module
        return self._table[None, :self.max_len, :]

    def forward(self, seq_len: int):
        return self._table[None, :seq_len, :]

    __call__ = forward


def _reference_pe(dim_out, max_len, n=10000.0):
    """Pure JAX reference matching the PyTorch __init__ formula."""
    pos = jnp.arange(max_len, dtype=jnp.float32)[:, None]
    i = jnp.arange(dim_out, dtype=jnp.float32)[None, :]
    angle_rates = 1.0 / jnp.power(jnp.float32(n), 2.0 * jnp.floor(i / 2.0) / dim_out)
    angle_rads = pos * angle_rates
    col = jnp.arange(dim_out)[None, :]
    return jnp.where(col % 2 == 0, jnp.sin(angle_rads), jnp.cos(angle_rads))[None, :, :]


if __name__ == "__main__":
    # forward() takes just an integer seq_len; key only to satisfy "construct inputs".
    _ = jax.random.PRNGKey(0)

    cases = [
        (64, 128, 8),     # 128 % dim_out == 0 -> packed to 512 lanes, no row padding
        (32, 100, 7),     # heavy packing (pack=16), rows padded
        (80, 96, 5),      # non-divisor dim -> lcm packing to 640 lanes (dense stores)
        (64, 1000, 16),   # the spec's default: PositionalEncoder(dim_out=64)
    ]
    for dim_out, max_len, seq_len in cases:
        mod = PositionalEncoder(dim_out=dim_out, max_len=max_len)
        out = jax.block_until_ready(mod(seq_len))
        assert out.shape == (1, seq_len, dim_out), out.shape
        ref = _reference_pe(dim_out, max_len)
        # sin(x + pi/2) rewrite + f64-precomputed rates differ from the f32
        # chained reference by a few ulps of the angle -> 1e-4 on O(1) outputs.
        assert jnp.allclose(out, ref[:, :seq_len], atol=1e-4, rtol=1e-4), (dim_out, max_len)
        assert mod.pe.shape == (1, max_len, dim_out)
        assert jnp.allclose(mod.pe, ref, atol=1e-4, rtol=1e-4), (dim_out, max_len)

    print("KERNEL_OK")
</pallas_src>

<mosaic_0001>
module attributes {stable_mosaic.version = 11 : i64} {
  func.func @_pe_kernel(%arg0: i32, %arg1: memref<1x512xf32, #tpu.memory_space<vmem>>, %arg2: memref<1x512xf32, #tpu.memory_space<vmem>>, %arg3: memref<8x512xf32, #tpu.memory_space<vmem>>) attributes {dimension_semantics = [#tpu.dimension_semantics<parallel>], iteration_bounds = array<i64: 2>, scalar_prefetch = 0 : i64, scratch_operands = 0 : i64, tpu.core_type = #tpu.core_type<tc>, window_params = [{pipeline_mode = #tpu.pipeline_mode<synchronous>, transform_indices = @transform_0, window_bounds = array<i64: 1, 512>}, {pipeline_mode = #tpu.pipeline_mode<synchronous>, transform_indices = @transform_1, window_bounds = array<i64: 1, 512>}, {transform_indices = @transform_2, window_bounds = array<i64: 8, 512>}]} {
    %c8_i32 = arith.constant 8 : i32
    %0 = arith.muli %arg0, %c8_i32 : i32
    %1 = tpu.iota {dimensions = array<i32: 0>} : vector<8x1xi32>
    %2 = vector.broadcast %0 : i32 to vector<8x1xi32>
    %3 = arith.addi %2, %1 : vector<8x1xi32>
    %4 = arith.sitofp %3 : vector<8x1xi32> to vector<8x1xf32>
    %c0 = arith.constant 0 : index
    %c0_0 = arith.constant 0 : index
    %5 = vector.load %arg1[%c0, %c0_0] : memref<1x512xf32, #tpu.memory_space<vmem>>, vector<1x512xf32>
    %6 = vector.broadcast %4 : vector<8x1xf32> to vector<8x512xf32>
    %7 = vector.broadcast %5 : vector<1x512xf32> to vector<8x512xf32>
    %8 = arith.mulf %6, %7 : vector<8x512xf32>
    %c0_1 = arith.constant 0 : index
    %c0_2 = arith.constant 0 : index
    %9 = vector.load %arg2[%c0_1, %c0_2] : memref<1x512xf32, #tpu.memory_space<vmem>>, vector<1x512xf32>
    %10 = vector.broadcast %9 : vector<1x512xf32> to vector<8x512xf32>
    %11 = arith.addf %8, %10 : vector<8x512xf32>
    %12 = math.sin %11 : vector<8x512xf32>
    %c0_3 = arith.constant 0 : index
    %c0_4 = arith.constant 0 : index
    %13 = vector.load %arg3[%c0_3, %c0_4] : memref<8x512xf32, #tpu.memory_space<vmem>>, vector<8x512xf32>
    tpu.vector_store %arg3[%c0_3, %c0_4], %12 {strides = array<i32>} : memref<8x512xf32, #tpu.memory_space<vmem>>, vector<8x512xf32>,
    return
  }
  func.func @transform_0(%arg0: i32) -> (i32, i32) {
    %c0_i32 = arith.constant 0 : i32
    %c0_i32_0 = arith.constant 0 : i32
    %c0_i32_1 = arith.constant 0 : i32
    return %c0_i32, %c0_i32_0 : i32, i32
  }
  func.func @transform_1(%arg0: i32) -> (i32, i32) {
    %c0_i32 = arith.constant 0 : i32
    %c0_i32_0 = arith.constant 0 : i32
    %c0_i32_1 = arith.constant 0 : i32
    return %c0_i32, %c0_i32_0 : i32, i32
  }
  func.func @transform_2(%arg0: i32) -> (i32, i32) {
    %c0_i32 = arith.constant 0 : i32
    %c0_i32_0 = arith.constant 0 : i32
    return %arg0, %c0_i32 : i32, i32
  }
}

</mosaic_0001>

<llo_original>
// kernel: tpu_custom_call.1
$region0: #{tpu_custom_call.1}
  #allocation0 [shape = 'u32[]', space=smem, size = 0x4, offset = 0x4, fixed_abs, tag = 'smem constant byte address 0x4 - core index']
  #allocation1 [shape = 'u32[144,128]{1,0:T(1,128)}', space=vmem, size = 0x12000, scoped, tag = 'internal scratch']
  %s0 = inlined_call_operand.hbm [shape: f32[1,512], index: 0, kind: input, shape index: {}]
  %s1 = inlined_call_operand.hbm [shape: f32[1,512], index: 1, kind: input, shape index: {}]
  %s2 = inlined_call_operand.hbm [shape: f32[16,512], index: 2, kind: output, shape index: {}]
  %s3 = sld [smem:[#allocation0]]
  $region49: #{tpu_custom_call.1} parent=0
    _
  %s5 = ssub.s32 1, %s3
  %s6 = scalar_select 0, %s5, %s3
  $region1: #{tpu_custom_call.1} parent=0
    #allocation2 [shape = 'u8[2048]{0}', space=vmem, size = 0x800, scoped, tag = 'input window, operand 0, single buffered']
    #allocation3 [shape = 's32[2]{0}', space=sflag, size = 0x8, scoped, tag = 'scoped memory for tpu_custom_call.1']
    #allocation4 [shape = 's32[2]{0}', space=sflag, size = 0x8, scoped, tag = 'scoped memory for tpu_custom_call.1']
    #allocation5 [shape = 'u8[2048]{0}', space=vmem, size = 0x800, scoped, tag = 'input window, operand 1, single buffered']
    #allocation6 [shape = 's32[1]{0}', space=sflag, size = 0x4, scoped, tag = 'scoped memory for tpu_custom_call.1']
    #allocation7 [shape = 'u8[32768]{0}', space=vmem, size = 0x8000, scoped, tag = 'output window, operand 0']
    %7 = vsyncpa [#allocation3], 0
    %8 = vsyncpa [#allocation6], 0
    %9 = vsyncpa [#allocation4], 0
    %s10 = scalar_lea.sflag [#allocation4], 1
    %11 = vsyncpa %s10, 0
    loop: start=0, step=1, limit=4
    $region2: #{tpu_custom_call.1} parent=1 // loop_pre_header
      _
    $region3: #{tpu_custom_call.1} parent=1 // loop_header
      %s13 = sphi 0, %s17
      %p14 = scmp.ge.s32.totalorder %s13, 4
      %s21 = sphi 0, %s21
      %s23 = sphi 0, %s21
      %s24 = sphi 0, %s23
      %s38 = sphi 0, %s24
      %s42 = sphi 0, %s42
      %s44 = sphi 0, %s42
      %s45 = sphi 0, %s44
      %s59 = sphi 0, %s45
      %s65 = sphi 0, %s67
      %s68 = sphi 0, %s65
      %s69 = sphi 0, %s68
      %s85 = sphi 0, %s69
    $region4: #{tpu_custom_call.1} parent=1 // loop_header_branch
      %16 = sbr.rel (%p14) target = $region8
    $region5: #{tpu_custom_call.1} parent=1 // loop_body
      %s18 = ssub.s32 %s13, 1
      %s19 = ssub.s32 %s13, 2
      %s20 = sadd.s32 %s13, 1
      %s22 = sadd.s32 %s21, 1
      %p25 = scmp.eq.s32.totalorder %s13, 1
      %p26 = scmp.ne.s32.totalorder %s21, %s23
      %p27 = scmp.eq.s32.totalorder %s13, 0
      %p28 = por %p26, %p27
      %p29 = scmp.ne.s32.totalorder %s21, %s23
      %p30 = scmp.eq.s32.totalorder %s18, 1
      %p31 = por %p29, %p30
      %p32 = scmp.ne.s32.totalorder %s23, %s24
      %p33 = scmp.eq.s32.totalorder %s18, 0
      %p34 = por %p32, %p33
      %p35 = scmp.ne.s32.totalorder %s23, %s24
      %p36 = scmp.eq.s32.totalorder %s19, 1
      %p37 = por %p35, %p36
      %p39 = scmp.ne.s32.totalorder %s24, %s38
      %p40 = scmp.eq.s32.totalorder %s19, 0
      %p41 = por %p39, %p40
      %s43 = sadd.s32 %s42, 1
      %p46 = scmp.eq.s32.totalorder %s13, 1
      %p47 = scmp.ne.s32.totalorder %s42, %s44
      %p48 = scmp.eq.s32.totalorder %s13, 0
      %p49 = por %p47, %p48
      %p50 = scmp.ne.s32.totalorder %s42, %s44
      %p51 = scmp.eq.s32.totalorder %s18, 1
      %p52 = por %p50, %p51
      %p53 = scmp.ne.s32.totalorder %s44, %s45
      %p54 = scmp.eq.s32.totalorder %s18, 0
      %p55 = por %p53, %p54
      %p56 = scmp.ne.s32.totalorder %s44, %s45
      %p57 = scmp.eq.s32.totalorder %s19, 1
      %p58 = por %p56, %p57
      %p60 = scmp.ne.s32.totalorder %s45, %s59
      %p61 = scmp.eq.s32.totalorder %s19, 0
      %p62 = por %p60, %p61
      %s63 = ssub.s32 %s13, %s20
      %p64 = scmp.eq.s32.totalorder %s63, 0
      %s66 = sadd.s32 %s65, 1
      %s67 = scalar_select %p64, %s65, %s66
      %p70 = pneg %p64
      %p71 = scmp.eq.s32.totalorder %s13, 1
      %p72 = por %p70, %p71
      %p73 = scmp.ne.s32.totalorder %s65, %s68
      %p74 = scmp.eq.s32.totalorder %s13, 0
      %p75 = por %p73, %p74
      %p76 = scmp.ne.s32.totalorder %s65, %s68
      %p77 = scmp.eq.s32.totalorder %s18, 1
      %p78 = por %p76, %p77
      %p79 = scmp.ne.s32.totalorder %s68, %s69
      %p80 = scmp.eq.s32.totalorder %s18, 0
      %p81 = por %p79, %p80
      %p82 = scmp.ne.s32.totalorder %s68, %s69
      %p83 = scmp.eq.s32.totalorder %s19, 1
      %p84 = por %p82, %p83
      %p86 = scmp.ne.s32.totalorder %s69, %s85
      %p87 = scmp.eq.s32.totalorder %s19, 0
      %p88 = por %p86, %p87
      %p89 = scmp.le.s32.totalorder 1, %s13
      %p90 = scmp.lt.s32.totalorder %s13, 3
      %p91 = pnand %p89, %p90
      %p92 = pneg %p91
      // Predicated region
      $region9: #{tpu_custom_call.1} parent=5 // pred_check
        _
      $region10: #{tpu_custom_call.1} parent=5 // pred_check_branch
        %94 = sbr.rel (%p91) target = $region12
      $region11: #{tpu_custom_call.1} parent=5 // pred_region
        %s95 = ssub.s32 %s13, 1
        // Predicated region
        $region13: #{tpu_custom_call.1} parent=11 // pred_check
          %p96 = pneg %p34
        $region14: #{tpu_custom_call.1} parent=11 // pred_check_branch
          %98 = sbr.rel (%p96) target = $region16
        $region15: #{tpu_custom_call.1} parent=11 // pred_region
          %s100 = ssub.s32 64, 64
          %101 = vsyncadd [#allocation3], %s100
          %s103 = sshll.u32 [#allocation2], 4
          %s104 = int_to_ptr.vmem [resolvable:$true] %s103
          %106 = dma.hbm_to_vmem [thread:$0]  %s0, 64, %s104, [#allocation3]
        $region16: #{tpu_custom_call.1} parent=11 // pred_fallthru
          _
        // Predicated region
        $region17: #{tpu_custom_call.1} parent=11 // pred_check
          %p107 = pneg %p55
        $region18: #{tpu_custom_call.1} parent=11 // pred_check_branch
          %109 = sbr.rel (%p107) target = $region20
        $region19: #{tpu_custom_call.1} parent=11 // pred_region
          %s111 = ssub.s32 64, 64
          %112 = vsyncadd [#allocation6], %s111
          %s114 = sshll.u32 [#allocation5], 4
          %s115 = int_to_ptr.vmem [resolvable:$true] %s114
          %117 = dma.hbm_to_vmem [thread:$0]  %s1, 64, %s115, [#allocation6]
        $region20: #{tpu_custom_call.1} parent=11 // pred_fallthru
          _
      $region12: #{tpu_custom_call.1} parent=5 // pred_fallthru
        _
      %p118 = scmp.lt.s32.totalorder %s13, 2
      // Predicated region
      $region21: #{tpu_custom_call.1} parent=5 // pred_check
        %p119 = pneg %p118
      $region22: #{tpu_custom_call.1} parent=5 // pred_check_branch
        %121 = sbr.rel (%p119) target = $region24
      $region23: #{tpu_custom_call.1} parent=5 // pred_region
        _
      $region24: #{tpu_custom_call.1} parent=5 // pred_fallthru
        _
      %p122 = scmp.le.s32.totalorder 1, %s13
      %p123 = scmp.lt.s32.totalorder %s13, 3
      %p124 = pnand %p122, %p123
      %p125 = pneg %p124
      // Predicated region
      $region25: #{tpu_custom_call.1} parent=5 // pred_check
        _
      $region26: #{tpu_custom_call.1} parent=5 // pred_check_branch
        %127 = sbr.rel (%p124) target = $region28
      $region27: #{tpu_custom_call.1} parent=5 // pred_region
        %s128 = ssub.s32 %s13, 1
        // Predicated region
        $region29: #{tpu_custom_call.1} parent=27 // pred_check
          %p129 = pneg %p34
        $region30: #{tpu_custom_call.1} parent=27 // pred_check_branch
          %131 = sbr.rel (%p129) target = $region32
        $region31: #{tpu_custom_call.1} parent=27 // pred_region
          %132 = dma.done [#allocation3], 64
        $region32: #{tpu_custom_call.1} parent=27 // pred_fallthru
          _
        // Predicated region
        $region33: #{tpu_custom_call.1} parent=27 // pred_check
          %p133 = pneg %p55
        $region34: #{tpu_custom_call.1} parent=27 // pred_check_branch
          %135 = sbr.rel (%p133) target = $region36
        $region35: #{tpu_custom_call.1} parent=27 // pred_region
          %136 = dma.done [#allocation6], 64
        $region36: #{tpu_custom_call.1} parent=27 // pred_fallthru
          _
        %p137 = pneg %p34
        %p138 = pneg %p31
        %p139 = pneg %p55
        %p140 = pneg %p52
        %p141 = pneg %p81
        %p142 = pneg %p78
        %s143 = sand.u32 %s68, 1
        %s144 = scalar_lea.sflag [#allocation4], %s143
        %s145 = sand.u32 %s68, 1
        %s146 = smul.addr %s145, 32
        %s147 = scalar_lea.vmem [#allocation7], %s146
        %s148 = smul.u32 %s18, 8
        %v149 = vlaneseq
        %v150 = vshrl.u32 %v149, 7
        %v151 = vstv %s148
        %v152 = vadd.s32 %v151, %v150
        %v153 = vcvt.s32.f32 %v152
        %v154 = vld [vmem:[#allocation2] sm:$0xf]
        %v156 = vlaneseq
        %v157 = vshrl.u32 %v156, 7
        %v158 = vsub.s32 0, %v157
        %v159 = vrot.slane %v154, %v158
        %v160 = vlaneseq
        %v161 = vshrl.u32 %v160, 7
        %v162 = vsub.s32 1, %v161
        %v163 = vrot.slane %v154, %v162
        %v164 = vlaneseq
        %v165 = vshrl.u32 %v164, 7
        %v166 = vsub.s32 2, %v165
        %v167 = vrot.slane %v154, %v166
        %v168 = vlaneseq
        %v169 = vshrl.u32 %v168, 7
        %v170 = vsub.s32 3, %v169
        %v171 = vrot.slane %v154, %v170
        %v176 = vmul.f32 %v153, %v159
        %v177 = vmul.f32 %v153, %v163
        %v178 = vmul.f32 %v153, %v167
        %v179 = vmul.f32 %v153, %v171
        %v180 = vld [vmem:[#allocation5] sm:$0xf]
        %v182 = vlaneseq
        %v183 = vshrl.u32 %v182, 7
        %v184 = vsub.s32 0, %v183
        %v185 = vrot.slane %v180, %v184
        %v186 = vlaneseq
        %v187 = vshrl.u32 %v186, 7
        %v188 = vsub.s32 1, %v187
        %v189 = vrot.slane %v180, %v188
        %v190 = vlaneseq
        %v191 = vshrl.u32 %v190, 7
        %v192 = vsub.s32 2, %v191
        %v193 = vrot.slane %v180, %v192
        %v194 = vlaneseq
        %v195 = vshrl.u32 %v194, 7
        %v196 = vsub.s32 3, %v195
        %v197 = vrot.slane %v180, %v196
        %v202 = vadd.f32 %v176, %v185
        %v203 = vadd.f32 %v177, %v189
        %v204 = vadd.f32 %v178, %v193
        %v205 = vadd.f32 %v179, %v197
        %v206 = vand.u32 2147483647, %v202
        %vm207 = vcmp.le.f32.partialorder %v206, 0.7853982
        %vm208 = vcmp.lt.s32.totalorder %v202, 0
        %v209 = vand.u32 %v202, 2139095040
        %v210 = vshrl.u32 %v209, 23
        %v211 = vsub.s32 %v210, 127
        %v212 = vand.u32 2147483647, %v202
        %v213 = vand.u32 %v212, 8388607
        %v214 = vor.u32 %v213, 8388608
        %v215 = vsub.s32 0, %v214
        %v216 = vadd.s32 %v211, 1
        %vm217 = vcmp.gt.s32.totalorder %v216, 0
        %v218 = vsel %vm217, %v216, 0
        %v219 = vshrl.u32 %v218, 5
        %v220 = vand.u32 %v218, 31
        %v221 = vsub.s32 32, %v220
        %v222 = vshrl.u32 683565275, %v221
        %v223 = vshll.u32 683565275, %v220
        %v224 = vshrl.u32 2475754826, %v221
        %v225 = vor.u32 %v223, %v224
        %v226 = vshll.u32 2475754826, %v220
        %v227 = vshrl.u32 2131351028, %v221
        %v228 = vor.u32 %v226, %v227
        %v229 = vshll.u32 2131351028, %v220
        %v230 = vshrl.u32 2102212464, %v221
        %v231 = vor.u32 %v229, %v230
        %v232 = vshll.u32 2102212464, %v220
        %v233 = vshrl.u32 920167782, %v221
        %v234 = vor.u32 %v232, %v233
        %v235 = vshll.u32 920167782, %v220
        %v236 = vshrl.u32 1326507024, %v221
        %v237 = vor.u32 %v235, %v236
        %vm238 = vcmp.lt.s32.totalorder %v219, 1
        %vm239 = vcmp.lt.s32.totalorder %v219, 2
        %vm240 = vcmp.lt.s32.totalorder %v219, 3
        %vm241 = vcmp.lt.s32.totalorder %v219, 4
        %v242 = vsel %vm238, %v222, %v225
        %v243 = vsel %vm241, %v231, 2102212464
        %v244 = vsel %vm240, %v228, %v243
        %v245 = vsel %vm239, %v242, %v244
        %v246 = vsel %vm238, %v225, %v228
        %v247 = vsel %vm241, %v234, 920167782
        %v248 = vsel %vm240, %v231, %v247
        %v249 = vsel %vm239, %v246, %v248
        %v250 = vsel %vm238, %v228, %v231
        %v251 = vsel %vm241, %v237, 1326507024
        %v252 = vsel %vm240, %v234, %v251
        %v253 = vsel %vm239, %v250, %v252
        %v254 = vshll.u32 %v214, 8
        %v255 = vmul.u32.u64.compose %v254, %v253
        %v256 = vextract.low.u32 %v255
        %v257 = vextract.high.u32 %v255
        %v258 = vmul.u32.u64.compose %v254, %v249
        %v259 = vextract.low.u32 %v258
        %v260 = vextract.high.u32 %v258
        %v261 = vmul.u32 %v254, %v245
        %v262 = vadd.s32 %v257, %v259
        %vm263 = vc.u32 %v257, %v259
        %v264 = vadd.s32 %v260, 1
        %v265 = vsel %vm263, %v264, %v260
        %v266 = vadd.s32 %v261, %v265
        %v267 = vadd.s32 %v266, 536870912
        %v268 = vshrl.u32 %v267, 30
        %v269 = vshll.u32 %v268, 30
        %v270 = vsub.s32 %v266, %v269
        %vm271 = vcmp.lt.s32.totalorder %v270, 0
        %v272 = vsub.s32 0, %v270
        %v273 = vsel %vm271, %v272, %v270
        %v274 = vclz %v273
        %v275 = vsub.s32 %v274, 2
        %vm276 = vcmp.gt.s32.totalorder 0, %v275
        %v277 = vsel %vm276, 0, %v275
        %v278 = vsub.s32 32, %v277
        %v279 = vshll.u32 %v270, %v277
        %v280 = vshrl.u32 %v262, %v278
        %v281 = vor.u32 %v279, %v280
        %v282 = vsub.s32 4294967266, %v277
        %v283 = vadd.s32 %v282, 127
        %v284 = vshll.u32 %v283, 23
        %v285 = vor.u32 4788187, %v284
        %v286 = vand.u32 2147483647, %v285
        %v288 = vcvt.s32.f32 %v281
        %v289 = vmul.f32 %v288, %v286
        %v290 = vxor.u32 %v289, 2147483648
        %v291 = vsel %vm208, %v290, %v289
        %v292 = vsub.s32 4, %v268
        %v293 = vsel %vm208, %v292, %v268
        %v294 = vsel %vm207, %v202, %v291
        %v295 = vsel %vm207, 0, %v293
        %v296 = vcosq.f32.pop %v294
        %v297 = vsinq.f32.pop %v294
        %vm298 = vweird.f32 %v202
        %v299 = vadd.s32 %v295, 3
        %v300 = vand.u32 %v299, 3
        %vm301 = vcmp.lt.s32.totalorder %v300, 2
        %vm302 = vcmp.eq.s32.totalorder %v300, 0
        %v303 = vxor.u32 %v297, 2147483648
        %v304 = vsel %vm302, %v296, %v303
        %vm305 = vcmp.eq.s32.totalorder %v300, 2
        %v306 = vxor.u32 %v296, 2147483648
        %v307 = vsel %vm305, %v306, %v297
        %v308 = vsel %vm301, %v304, %v307
        %v309 = vsel %vm298, nan, %v308
        %v310 = vand.u32 2147483647, %v203
        %vm311 = vcmp.le.f32.partialorder %v310, 0.7853982
        %vm312 = vcmp.lt.s32.totalorder %v203, 0
        %v313 = vand.u32 %v203, 2139095040
        %v314 = vshrl.u32 %v313, 23
        %v315 = vsub.s32 %v314, 127
        %v316 = vand.u32 2147483647, %v203
        %v317 = vand.u32 %v316, 8388607
        %v318 = vor.u32 %v317, 8388608
        %v319 = vsub.s32 0, %v318
        %v320 = vadd.s32 %v315, 1
        %vm321 = vcmp.gt.s32.totalorder %v320, 0
        %v322 = vsel %vm321, %v320, 0
        %v323 = vshrl.u32 %v322, 5
        %v324 = vand.u32 %v322, 31
        %v325 = vsub.s32 32, %v324
        %v326 = vshrl.u32 683565275, %v325
        %v327 = vshll.u32 683565275, %v324
        %v328 = vshrl.u32 2475754826, %v325
        %v329 = vor.u32 %v327, %v328
        %v330 = vshll.u32 2475754826, %v324
        %v331 = vshrl.u32 2131351028, %v325
        %v332 = vor.u32 %v330, %v331
        %v333 = vshll.u32 2131351028, %v324
        %v334 = vshrl.u32 2102212464, %v325
        %v335 = vor.u32 %v333, %v334
        %v336 = vshll.u32 2102212464, %v324
        %v337 = vshrl.u32 920167782, %v325
        %v338 = vor.u32 %v336, %v337
        %v339 = vshll.u32 920167782, %v324
        %v340 = vshrl.u32 1326507024, %v325
        %v341 = vor.u32 %v339, %v340
        %vm342 = vcmp.lt.s32.totalorder %v323, 1
        %vm343 = vcmp.lt.s32.totalorder %v323, 2
        %vm344 = vcmp.lt.s32.totalorder %v323, 3
        %vm345 = vcmp.lt.s32.totalorder %v323, 4
        %v346 = vsel %vm342, %v326, %v329
        %v347 = vsel %vm345, %v335, 2102212464
        %v348 = vsel %vm344, %v332, %v347
        %v349 = vsel %vm343, %v346, %v348
        %v350 = vsel %vm342, %v329, %v332
        %v351 = vsel %vm345, %v338, 920167782
        %v352 = vsel %vm344, %v335, %v351
        %v353 = vsel %vm343, %v350, %v352
        %v354 = vsel %vm342, %v332, %v335
        %v355 = vsel %vm345, %v341, 1326507024
        %v356 = vsel %vm344, %v338, %v355
        %v357 = vsel %vm343, %v354, %v356
        %v358 = vshll.u32 %v318, 8
        %v359 = vmul.u32.u64.compose %v358, %v357
        %v360 = vextract.low.u32 %v359
        %v361 = vextract.high.u32 %v359
        %v362 = vmul.u32.u64.compose %v358, %v353
        %v363 = vextract.low.u32 %v362
        %v364 = vextract.high.u32 %v362
        %v365 = vmul.u32 %v358, %v349
        %v366 = vadd.s32 %v361, %v363
        %vm367 = vc.u32 %v361, %v363
        %v368 = vadd.s32 %v364, 1
        %v369 = vsel %vm367, %v368, %v364
        %v370 = vadd.s32 %v365, %v369
        %v371 = vadd.s32 %v370, 536870912
        %v372 = vshrl.u32 %v371, 30
        %v373 = vshll.u32 %v372, 30
        %v374 = vsub.s32 %v370, %v373
        %vm375 = vcmp.lt.s32.totalorder %v374, 0
        %v376 = vsub.s32 0, %v374
        %v377 = vsel %vm375, %v376, %v374
        %v378 = vclz %v377
        %v379 = vsub.s32 %v378, 2
        %vm380 = vcmp.gt.s32.totalorder 0, %v379
        %v381 = vsel %vm380, 0, %v379
        %v382 = vsub.s32 32, %v381
        %v383 = vshll.u32 %v374, %v381
        %v384 = vshrl.u32 %v366, %v382
        %v385 = vor.u32 %v383, %v384
        %v386 = vsub.s32 4294967266, %v381
        %v387 = vadd.s32 %v386, 127
        %v388 = vshll.u32 %v387, 23
        %v389 = vor.u32 4788187, %v388
        %v390 = vand.u32 2147483647, %v389
        %v392 = vcvt.s32.f32 %v385
        %v393 = vmul.f32 %v392, %v390
        %v394 = vxor.u32 %v393, 2147483648
        %v395 = vsel %vm312, %v394, %v393
        %v396 = vsub.s32 4, %v372
        %v397 = vsel %vm312, %v396, %v372
        %v398 = vsel %vm311, %v203, %v395
        %v399 = vsel %vm311, 0, %v397
        %v400 = vcosq.f32.pop %v398
        %v401 = vsinq.f32.pop %v398
        %vm402 = vweird.f32 %v203
        %v403 = vadd.s32 %v399, 3
        %v404 = vand.u32 %v403, 3
        %vm405 = vcmp.lt.s32.totalorder %v404, 2
        %vm406 = vcmp.eq.s32.totalorder %v404, 0
        %v407 = vxor.u32 %v401, 2147483648
        %v408 = vsel %vm406, %v400, %v407
        %vm409 = vcmp.eq.s32.totalorder %v404, 2
        %v410 = vxor.u32 %v400, 2147483648
        %v411 = vsel %vm409, %v410, %v401
        %v412 = vsel %vm405, %v408, %v411
        %v413 = vsel %vm402, nan, %v412
        %v414 = vand.u32 2147483647, %v204
        %vm415 = vcmp.le.f32.partialorder %v414, 0.7853982
        %vm416 = vcmp.lt.s32.totalorder %v204, 0
        %v417 = vand.u32 %v204, 2139095040
        %v418 = vshrl.u32 %v417, 23
        %v419 = vsub.s32 %v418, 127
        %v420 = vand.u32 2147483647, %v204
        %v421 = vand.u32 %v420, 8388607
        %v422 = vor.u32 %v421, 8388608
        %v423 = vsub.s32 0, %v422
        %v424 = vadd.s32 %v419, 1
        %vm425 = vcmp.gt.s32.totalorder %v424, 0
        %v426 = vsel %vm425, %v424, 0
        %v427 = vshrl.u32 %v426, 5
        %v428 = vand.u32 %v426, 31
        %v429 = vsub.s32 32, %v428
        %v430 = vshrl.u32 683565275, %v429
        %v431 = vshll.u32 683565275, %v428
        %v432 = vshrl.u32 2475754826, %v429
        %v433 = vor.u32 %v431, %v432
        %v434 = vshll.u32 2475754826, %v428
        %v435 = vshrl.u32 2131351028, %v429
        %v436 = vor.u32 %v434, %v435
        %v437 = vshll.u32 2131351028, %v428
        %v438 = vshrl.u32 2102212464, %v429
        %v439 = vor.u32 %v437, %v438
        %v440 = vshll.u32 2102212464, %v428
        %v441 = vshrl.u32 920167782, %v429
        %v442 = vor.u32 %v440, %v441
        %v443 = vshll.u32 920167782, %v428
        %v444 = vshrl.u32 1326507024, %v429
        %v445 = vor.u32 %v443, %v444
        %vm446 = vcmp.lt.s32.totalorder %v427, 1
        %vm447 = vcmp.lt.s32.totalorder %v427, 2
        %vm448 = vcmp.lt.s32.totalorder %v427, 3
        %vm449 = vcmp.lt.s32.totalorder %v427, 4
        %v450 = vsel %vm446, %v430, %v433
        %v451 = vsel %vm449, %v439, 2102212464
        %v452 = vsel %vm448, %v436, %v451
        %v453 = vsel %vm447, %v450, %v452
        %v454 = vsel %vm446, %v433, %v436
        %v455 = vsel %vm449, %v442, 920167782
        %v456 = vsel %vm448, %v439, %v455
        %v457 = vsel %vm447, %v454, %v456
        %v458 = vsel %vm446, %v436, %v439
        %v459 = vsel %vm449, %v445, 1326507024
        %v460 = vsel %vm448, %v442, %v459
        %v461 = vsel %vm447, %v458, %v460
        %v462 = vshll.u32 %v422, 8
        %v463 = vmul.u32.u64.compose %v462, %v461
        %v464 = vextract.low.u32 %v463
        %v465 = vextract.high.u32 %v463
        %v466 = vmul.u32.u64.compose %v462, %v457
        %v467 = vextract.low.u32 %v466
        %v468 = vextract.high.u32 %v466
        %v469 = vmul.u32 %v462, %v453
        %v470 = vadd.s32 %v465, %v467
        %vm471 = vc.u32 %v465, %v467
        %v472 = vadd.s32 %v468, 1
        %v473 = vsel %vm471, %v472, %v468
        %v474 = vadd.s32 %v469, %v473
        %v475 = vadd.s32 %v474, 536870912
        %v476 = vshrl.u32 %v475, 30
        %v477 = vshll.u32 %v476, 30
        %v478 = vsub.s32 %v474, %v477
        %vm479 = vcmp.lt.s32.totalorder %v478, 0
        %v480 = vsub.s32 0, %v478
        %v481 = vsel %vm479, %v480, %v478
        %v482 = vclz %v481
        %v483 = vsub.s32 %v482, 2
        %vm484 = vcmp.gt.s32.totalorder 0, %v483
        %v485 = vsel %vm484, 0, %v483
        %v486 = vsub.s32 32, %v485
        %v487 = vshll.u32 %v478, %v485
        %v488 = vshrl.u32 %v470, %v486
        %v489 = vor.u32 %v487, %v488
        %v490 = vsub.s32 4294967266, %v485
        %v491 = vadd.s32 %v490, 127
        %v492 = vshll.u32 %v491, 23
        %v493 = vor.u32 4788187, %v492
        %v494 = vand.u32 2147483647, %v493
        %v496 = vcvt.s32.f32 %v489
        %v497 = vmul.f32 %v496, %v494
        %v498 = vxor.u32 %v497, 2147483648
        %v499 = vsel %vm416, %v498, %v497
        %v500 = vsub.s32 4, %v476
        %v501 = vsel %vm416, %v500, %v476
        %v502 = vsel %vm415, %v204, %v499
        %v503 = vsel %vm415, 0, %v501
        %v504 = vcosq.f32.pop %v502
        %v505 = vsinq.f32.pop %v502
        %vm506 = vweird.f32 %v204
        %v507 = vadd.s32 %v503, 3
        %v508 = vand.u32 %v507, 3
        %vm509 = vcmp.lt.s32.totalorder %v508, 2
        %vm510 = vcmp.eq.s32.totalorder %v508, 0
        %v511 = vxor.u32 %v505, 2147483648
        %v512 = vsel %vm510, %v504, %v511
        %vm513 = vcmp.eq.s32.totalorder %v508, 2
        %v514 = vxor.u32 %v504, 2147483648
        %v515 = vsel %vm513, %v514, %v505
        %v516 = vsel %vm509, %v512, %v515
        %v517 = vsel %vm506, nan, %v516
        %v518 = vand.u32 2147483647, %v205
        %vm519 = vcmp.le.f32.partialorder %v518, 0.7853982
        %vm520 = vcmp.lt.s32.totalorder %v205, 0
        %v521 = vand.u32 %v205, 2139095040
        %v522 = vshrl.u32 %v521, 23
        %v523 = vsub.s32 %v522, 127
        %v524 = vand.u32 2147483647, %v205
        %v525 = vand.u32 %v524, 8388607
        %v526 = vor.u32 %v525, 8388608
        %v527 = vsub.s32 0, %v526
        %v528 = vadd.s32 %v523, 1
        %vm529 = vcmp.gt.s32.totalorder %v528, 0
        %v530 = vsel %vm529, %v528, 0
        %v531 = vshrl.u32 %v530, 5
        %v532 = vand.u32 %v530, 31
        %v533 = vsub.s32 32, %v532
        %v534 = vshrl.u32 683565275, %v533
        %v535 = vshll.u32 683565275, %v532
        %v536 = vshrl.u32 2475754826, %v533
        %v537 = vor.u32 %v535, %v536
        %v538 = vshll.u32 2475754826, %v532
        %v539 = vshrl.u32 2131351028, %v533
        %v540 = vor.u32 %v538, %v539
        %v541 = vshll.u32 2131351028, %v532
        %v542 = vshrl.u32 2102212464, %v533
        %v543 = vor.u32 %v541, %v542
        %v544 = vshll.u32 2102212464, %v532
        %v545 = vshrl.u32 920167782, %v533
        %v546 = vor.u32 %v544, %v545
        %v547 = vshll.u32 920167782, %v532
        %v548 = vshrl.u32 1326507024, %v533
        %v549 = vor.u32 %v547, %v548
        %vm550 = vcmp.lt.s32.totalorder %v531, 1
        %vm551 = vcmp.lt.s32.totalorder %v531, 2
        %vm552 = vcmp.lt.s32.totalorder %v531, 3
        %vm553 = vcmp.lt.s32.totalorder %v531, 4
        %v554 = vsel %vm550, %v534, %v537
        %v555 = vsel %vm553, %v543, 2102212464
        %v556 = vsel %vm552, %v540, %v555
        %v557 = vsel %vm551, %v554, %v556
        %v558 = vsel %vm550, %v537, %v540
        %v559 = vsel %vm553, %v546, 920167782
        %v560 = vsel %vm552, %v543, %v559
        %v561 = vsel %vm551, %v558, %v560
        %v562 = vsel %vm550, %v540, %v543
        %v563 = vsel %vm553, %v549, 1326507024
        %v564 = vsel %vm552, %v546, %v563
        %v565 = vsel %vm551, %v562, %v564
        %v566 = vshll.u32 %v526, 8
        %v567 = vmul.u32.u64.compose %v566, %v565
        %v568 = vextract.low.u32 %v567
        %v569 = vextract.high.u32 %v567
        %v570 = vmul.u32.u64.compose %v566, %v561
        %v571 = vextract.low.u32 %v570
        %v572 = vextract.high.u32 %v570
        %v573 = vmul.u32 %v566, %v557
        %v574 = vadd.s32 %v569, %v571
        %vm575 = vc.u32 %v569, %v571
        %v576 = vadd.s32 %v572, 1
        %v577 = vsel %vm575, %v576, %v572
        %v578 = vadd.s32 %v573, %v577
        %v579 = vadd.s32 %v578, 536870912
        %v580 = vshrl.u32 %v579, 30
        %v581 = vshll.u32 %v580, 30
        %v582 = vsub.s32 %v578, %v581
        %vm583 = vcmp.lt.s32.totalorder %v582, 0
        %v584 = vsub.s32 0, %v582
        %v585 = vsel %vm583, %v584, %v582
        %v586 = vclz %v585
        %v587 = vsub.s32 %v586, 2
        %vm588 = vcmp.gt.s32.totalorder 0, %v587
        %v589 = vsel %vm588, 0, %v587
        %v590 = vsub.s32 32, %v589
        %v591 = vshll.u32 %v582, %v589
        %v592 = vshrl.u32 %v574, %v590
        %v593 = vor.u32 %v591, %v592
        %v594 = vsub.s32 4294967266, %v589
        %v595 = vadd.s32 %v594, 127
        %v596 = vshll.u32 %v595, 23
        %v597 = vor.u32 4788187, %v596
        %v598 = vand.u32 2147483647, %v597
        %v600 = vcvt.s32.f32 %v593
        %v601 = vmul.f32 %v600, %v598
        %v602 = vxor.u32 %v601, 2147483648
        %v603 = vsel %vm520, %v602, %v601
        %v604 = vsub.s32 4, %v580
        %v605 = vsel %vm520, %v604, %v580
        %v606 = vsel %vm519, %v205, %v603
        %v607 = vsel %vm519, 0, %v605
        %v608 = vcosq.f32.pop %v606
        %v609 = vsinq.f32.pop %v606
        %vm610 = vweird.f32 %v205
        %v611 = vadd.s32 %v607, 3
        %v612 = vand.u32 %v611, 3
        %vm613 = vcmp.lt.s32.totalorder %v612, 2
        %vm614 = vcmp.eq.s32.totalorder %v612, 0
        %v615 = vxor.u32 %v609, 2147483648
        %v616 = vsel %vm614, %v608, %v615
        %vm617 = vcmp.eq.s32.totalorder %v612, 2
        %v618 = vxor.u32 %v608, 2147483648
        %v619 = vsel %vm617, %v618, %v609
        %v620 = vsel %vm613, %v616, %v619
        %v621 = vsel %vm610, nan, %v620
        %622 = vst [vmem:[%s147] sm:$0xff] %v309
        %623 = vst [vmem:[%s147 + $0x8] sm:$0xff] %v413
        %624 = vst [vmem:[%s147 + $0x10] sm:$0xff] %v517
        %625 = vst [vmem:[%s147 + $0x18] sm:$0xff] %v621
        %s626 = sand.u32 %s68, 1
        %s627 = scalar_lea.sflag [#allocation4], %s626
        %s628 = sand.u32 %s68, 1
        %s629 = smul.addr %s628, 32
        %s630 = scalar_lea.vmem [#allocation7], %s629
        // Predicated region
        $region37: #{tpu_custom_call.1} parent=27 // pred_check
          %p631 = pneg %p78
        $region38: #{tpu_custom_call.1} parent=27 // pred_check_branch
          %633 = sbr.rel (%p631) target = $region40
        $region39: #{tpu_custom_call.1} parent=27 // pred_region
          %s635 = ssub.s32 512, 512
          %636 = vsyncadd %s627, %s635
          %s637 = smul.addr %s18, 4
          %s638 = smul.addr %s637, 128
          %s639 = scalar_lea.hbm %s2, %s638
          %s641 = sshll.u32 %s630, 4
          %s642 = int_to_ptr.vmem [resolvable:$true] %s641
          %644 = dma.vmem_to_hbm [thread:$0]  %s642, 512, %s639, %s627
        $region40: #{tpu_custom_call.1} parent=27 // pred_fallthru
          _
      $region28: #{tpu_custom_call.1} parent=5 // pred_fallthru
        _
      %p645 = scmp.le.s32.totalorder 2, %s13
      // Predicated region
      $region41: #{tpu_custom_call.1} parent=5 // pred_check
        %p646 = pneg %p645
      $region42: #{tpu_custom_call.1} parent=5 // pred_check_branch
        %648 = sbr.rel (%p646) target = $region44
      $region43: #{tpu_custom_call.1} parent=5 // pred_region
        %s649 = ssub.s32 %s13, 2
        // Predicated region
        $region45: #{tpu_custom_call.1} parent=43 // pred_check
          %p650 = pneg %p84
        $region46: #{tpu_custom_call.1} parent=43 // pred_check_branch
          %652 = sbr.rel (%p650) target = $region48
        $region47: #{tpu_custom_call.1} parent=43 // pred_region
          %s653 = sand.u32 %s69, 1
          %s654 = scalar_lea.sflag [#allocation4], %s653
          %s655 = sand.u32 %s69, 1
          %s656 = smul.addr %s655, 32
          %s657 = scalar_lea.vmem [#allocation7], %s656
          %658 = dma.done %s654, 512
        $region48: #{tpu_custom_call.1} parent=43 // pred_fallthru
          _
      $region44: #{tpu_custom_call.1} parent=5 // pred_fallthru
        _
    $region6: #{tpu_custom_call.1} parent=1 // loop_footer
      %s17 = sadd.s32 1, %s13
    $region7: #{tpu_custom_call.1} parent=1 // loop_footer_branch
      %12 = sbr.rel target = $region3
    $region8: #{tpu_custom_call.1} parent=1 // loop_exit
      _
    %659 = vsyncpa [#allocation3], 1
    %s660 = scalar_lea.sflag [#allocation3], 1
    %661 = vsyncpa %s660, 1
    %662 = vsyncpa [#allocation6], 1
    %663 = vsyncpa [#allocation4], 1
    %s664 = scalar_lea.sflag [#allocation4], 1
    %665 = vsyncpa %s664, 1

</llo_original>
